<compile_context>
chip_gen: v5e
topology: v5e:2x2
jax: 0.10.0
libtpu: 0.0.40
codegen_flags: <defaults>
</compile_context>

<pallas_src>
import math
import functools

import jax
import jax.numpy as jnp
from jax import lax
from jax.experimental import pallas as pl
from jax.experimental.pallas import tpu as pltpu

LN_EPS = 1e-6  # config.layer_norm_epsilon


def _rms_norm_f32(x, w):
    """T5LayerNorm: RMS norm (no mean subtraction, no bias), f32 math."""
    var = jnp.mean(x * x, axis=-1, keepdims=True)
    return x * jax.lax.rsqrt(var + LN_EPS) * w


# ------------------------- Pallas kernels (hot path) -------------------------

def _qkv_proj_kernel(x_ref, lnw_ref, wq_ref, wk_ref, wv_ref, q_ref, k_ref, v_ref):
    """RMSNorm + Q/K/V projections for one (batch, q-tile) block."""
    x = x_ref[0].astype(jnp.float32)                               # (tq, D)
    nx = _rms_norm_f32(x, lnw_ref[0].astype(jnp.float32)).astype(jnp.bfloat16)
    q_ref[0] = jnp.dot(nx, wq_ref[...],
                       preferred_element_type=jnp.float32).astype(q_ref.dtype)
    k_ref[0] = jnp.dot(nx, wk_ref[...],
                       preferred_element_type=jnp.float32).astype(k_ref.dtype)
    v_ref[0] = jnp.dot(nx, wv_ref[...],
                       preferred_element_type=jnp.float32).astype(v_ref.dtype)


def _flash_attn_kernel(x_ref, q_ref, k_ref, v_ref, bias_ref, wo_ref, o_ref,
                       m_sc, l_sc, acc_sc, *, n_heads, d_kv):
    """Online-softmax self-attention over KV tiles + output projection + residual.

    grid = (B, S//tq, S//tk); the kv axis (2) is the reduction axis.
    T5: no 1/sqrt(d_kv) scaling; scores get the relative-position bias added.
    """
    ki = pl.program_id(2)
    nk = pl.num_programs(2)

    @pl.when(ki == 0)
    def _init():
        m_sc[...] = jnp.full_like(m_sc, -jnp.inf)
        l_sc[...] = jnp.zeros_like(l_sc)
        acc_sc[...] = jnp.zeros_like(acc_sc)

    q = q_ref[0]                                                   # (tq, H*dk) bf16
    k = k_ref[0]                                                   # (tk, H*dk) bf16
    v = v_ref[0]                                                   # (tk, H*dk) bf16

    for h in range(n_heads):                                       # static unroll
        sl = slice(h * d_kv, (h + 1) * d_kv)
        qh, kh, vh = q[:, sl], k[:, sl], v[:, sl]                  # (t, dk)
        # scores = qh @ kh^T without an explicit transpose: contract last dims.
        s = lax.dot_general(qh, kh, (((1,), (1,)), ((), ())),
                            preferred_element_type=jnp.float32)    # (tq, tk)
        s = s + bias_ref[h]                                        # relative bias tile
        m_prev = m_sc[h]                                           # (tq, 1)
        m_new = jnp.maximum(m_prev, jnp.max(s, axis=-1, keepdims=True))
        alpha = jnp.exp(m_prev - m_new)
        p = jnp.exp(s - m_new)                                     # (tq, tk) f32
        l_sc[h] = alpha * l_sc[h] + jnp.sum(p, axis=-1, keepdims=True)
        acc_sc[h] = alpha * acc_sc[h] + jnp.dot(
            p.astype(jnp.bfloat16), vh, preferred_element_type=jnp.float32)
        m_sc[h] = m_new

    @pl.when(ki == nk - 1)
    def _finalize():
        x = x_ref[0].astype(jnp.float32)                           # (tq, D)
        attn = jnp.zeros(x.shape, jnp.float32)
        for h in range(n_heads):                                   # static unroll
            ctx_h = acc_sc[h] * pl.reciprocal(l_sc[h], approx=True)
            attn = attn + jnp.dot(ctx_h.astype(jnp.bfloat16), wo_ref[h],
                                  preferred_element_type=jnp.float32)
        o_ref[0] = (x + attn).astype(o_ref.dtype)                  # residual


def _ff_kernel(x_ref, lnw_ref, wi_ref, wo_ref, o_ref, nx_sc, acc_sc):
    """T5LayerFF with d_ff tiled as a reduction grid axis (axis 2)."""
    fi = pl.program_id(2)
    nf = pl.num_programs(2)

    @pl.when(fi == 0)
    def _init():
        x = x_ref[0].astype(jnp.float32)
        nx_sc[...] = _rms_norm_f32(x, lnw_ref[0].astype(jnp.float32)).astype(jnp.bfloat16)
        acc_sc[...] = jnp.zeros_like(acc_sc)

    h = jnp.dot(nx_sc[...], wi_ref[...], preferred_element_type=jnp.float32)
    h = jnp.maximum(h, 0.0)                                        # ReLU
    acc_sc[...] += jnp.dot(h.astype(jnp.bfloat16), wo_ref[...],
                           preferred_element_type=jnp.float32)

    @pl.when(fi == nf - 1)
    def _finalize():
        x = x_ref[0].astype(jnp.float32)
        o_ref[0] = (x + acc_sc[...]).astype(o_ref.dtype)           # residual


# ------------------------------- wrappers ------------------------------------

def t5_qkv_proj(hidden, ln_w, wq, wk, wv, *, tq):
    B, S, D = hidden.shape
    inner = wq.shape[1]
    out_sds = jax.ShapeDtypeStruct((B, S, inner), jnp.bfloat16)
    return pl.pallas_call(
        _qkv_proj_kernel,
        out_shape=(out_sds, out_sds, out_sds),
        grid_spec=pltpu.PrefetchScalarGridSpec(
            num_scalar_prefetch=0,
            grid=(B, S // tq),
            in_specs=[
                pl.BlockSpec((1, tq, D), lambda b, i: (b, i, 0)),
                pl.BlockSpec((1, D), lambda b, i: (0, 0)),
                pl.BlockSpec((D, inner), lambda b, i: (0, 0)),
                pl.BlockSpec((D, inner), lambda b, i: (0, 0)),
                pl.BlockSpec((D, inner), lambda b, i: (0, 0)),
            ],
            out_specs=[
                pl.BlockSpec((1, tq, inner), lambda b, i: (b, i, 0)),
                pl.BlockSpec((1, tq, inner), lambda b, i: (b, i, 0)),
                pl.BlockSpec((1, tq, inner), lambda b, i: (b, i, 0)),
            ],
        ),
        compiler_params=pltpu.CompilerParams(
            dimension_semantics=("parallel", "parallel")),
    )(hidden, ln_w, wq, wk, wv)


def t5_flash_self_attention(hidden, q, k, v, wo, pos_bias, *, n_heads, d_kv, tq, tk):
    B, S, D = hidden.shape
    inner = n_heads * d_kv
    wo3 = wo.reshape(n_heads, d_kv, D)          # per-head output-projection slices
    kernel = functools.partial(_flash_attn_kernel, n_heads=n_heads, d_kv=d_kv)
    return pl.pallas_call(
        kernel,
        out_shape=jax.ShapeDtypeStruct((B, S, D), hidden.dtype),
        grid_spec=pltpu.PrefetchScalarGridSpec(
            num_scalar_prefetch=0,
            grid=(B, S // tq, S // tk),
            in_specs=[
                pl.BlockSpec((1, tq, D), lambda b, qi, ki: (b, qi, 0)),      # residual
                pl.BlockSpec((1, tq, inner), lambda b, qi, ki: (b, qi, 0)),  # Q
                pl.BlockSpec((1, tk, inner), lambda b, qi, ki: (b, ki, 0)),  # K
                pl.BlockSpec((1, tk, inner), lambda b, qi, ki: (b, ki, 0)),  # V
                pl.BlockSpec((n_heads, tq, tk), lambda b, qi, ki: (0, qi, ki)),
                pl.BlockSpec((n_heads, d_kv, D), lambda b, qi, ki: (0, 0, 0)),
            ],
            out_specs=pl.BlockSpec((1, tq, D), lambda b, qi, ki: (b, qi, 0)),
            scratch_shapes=[
                pltpu.VMEM((n_heads, tq, 1), jnp.float32),     # running max
                pltpu.VMEM((n_heads, tq, 1), jnp.float32),     # running denom
                pltpu.VMEM((n_heads, tq, d_kv), jnp.float32),  # context accumulator
            ],
        ),
        compiler_params=pltpu.CompilerParams(
            dimension_semantics=("parallel", "parallel", "arbitrary")),
    )(hidden, q, k, v, pos_bias, wo3)


def t5_ff_layer(hidden, ln_w, wi, wo, *, tq, tf):
    B, S, D = hidden.shape
    d_ff = wi.shape[1]
    return pl.pallas_call(
        _ff_kernel,
        out_shape=jax.ShapeDtypeStruct((B, S, D), hidden.dtype),
        grid_spec=pltpu.PrefetchScalarGridSpec(
            num_scalar_prefetch=0,
            grid=(B, S // tq, d_ff // tf),
            in_specs=[
                pl.BlockSpec((1, tq, D), lambda b, i, f: (b, i, 0)),
                pl.BlockSpec((1, D), lambda b, i, f: (0, 0)),
                pl.BlockSpec((D, tf), lambda b, i, f: (0, f)),
                pl.BlockSpec((tf, D), lambda b, i, f: (f, 0)),
            ],
            out_specs=pl.BlockSpec((1, tq, D), lambda b, i, f: (b, i, 0)),
            scratch_shapes=[
                pltpu.VMEM((tq, D), jnp.bfloat16),   # normed activations
                pltpu.VMEM((tq, D), jnp.float32),    # output accumulator
            ],
        ),
        compiler_params=pltpu.CompilerParams(
            dimension_semantics=("parallel", "parallel", "arbitrary")),
    )(hidden, ln_w, wi, wo)


# -------------------- position-bias glue (plain JAX, integer work) -----------

def _relative_position_bucket(relative_position, bidirectional=True,
                              num_buckets=32, max_distance=128):
    ret = jnp.zeros_like(relative_position)
    n = -relative_position
    if bidirectional:
        num_buckets //= 2
        ret = ret + (n < 0).astype(jnp.int32) * num_buckets
        n = jnp.abs(n)
    else:
        n = jnp.maximum(n, 0)
    max_exact = num_buckets // 2
    is_small = n < max_exact
    # clamp the log argument so the unselected branch never produces -inf -> int32
    val_if_large = max_exact + (
        jnp.log(jnp.maximum(n, 1).astype(jnp.float32) / max_exact)
        / math.log(max_distance / max_exact)
        * (num_buckets - max_exact)
    ).astype(jnp.int32)
    val_if_large = jnp.minimum(val_if_large, num_buckets - 1)
    ret = ret + jnp.where(is_small, n, val_if_large)
    return ret


def compute_position_bias(qlen, klen, rel_emb, *, num_buckets=32, bidirectional=True):
    context_position = jnp.arange(qlen, dtype=jnp.int32)[:, None]
    memory_position = jnp.arange(klen, dtype=jnp.int32)[None, :]
    relative_position = memory_position - context_position
    rp_bucket = _relative_position_bucket(relative_position,
                                          bidirectional=bidirectional,
                                          num_buckets=num_buckets)
    values = rel_emb[rp_bucket]                  # (qlen, klen, n_heads)
    return jnp.transpose(values, (2, 0, 1))      # (n_heads, qlen, klen)


def t5_block_forward(hidden, params, *, n_heads, d_kv, num_buckets,
                     tq=128, tk=128, tf=128):
    """Encoder T5Block: SelfAttention layer + FF layer (Pallas kernels)."""
    B, S, D = hidden.shape
    d_ff = params["wi"].shape[1]
    tq, tk, tf = min(tq, S), min(tk, S), min(tf, d_ff)
    assert S % tq == 0 and S % tk == 0 and d_ff % tf == 0

    bf = jnp.bfloat16
    pos_bias = compute_position_bias(S, S, params["rel_emb"],
                                     num_buckets=num_buckets, bidirectional=True)
    q, k, v = t5_qkv_proj(hidden, params["ln1_w"], params["wq"].astype(bf),
                          params["wk"].astype(bf), params["wv"].astype(bf), tq=tq)
    h = t5_flash_self_attention(hidden, q, k, v, params["wo"].astype(bf), pos_bias,
                                n_heads=n_heads, d_kv=d_kv, tq=tq, tk=tk)
    out = t5_ff_layer(h, params["ln2_w"], params["wi"].astype(bf),
                      params["wo_ff"].astype(bf), tq=tq, tf=tf)
    return out, pos_bias


# ------------------------------ pure-JAX reference ---------------------------

def _reference(hidden, params, pos_bias, *, n_heads, d_kv):
    """Reference with the same bf16 matmul-operand / f32-accumulate policy."""
    bf, f32 = jnp.bfloat16, jnp.float32

    def rms(x, w):
        var = jnp.mean(x * x, axis=-1, keepdims=True)
        return x * jax.lax.rsqrt(var + LN_EPS) * w[0]

    B, S, D = hidden.shape
    inner = n_heads * d_kv
    nx = rms(hidden, params["ln1_w"]).astype(bf)
    q = jnp.dot(nx, params["wq"].astype(bf), preferred_element_type=f32).astype(bf)
    k = jnp.dot(nx, params["wk"].astype(bf), preferred_element_type=f32).astype(bf)
    v = jnp.dot(nx, params["wv"].astype(bf), preferred_element_type=f32).astype(bf)
    q = q.reshape(B, S, n_heads, d_kv).transpose(0, 2, 1, 3)
    k = k.reshape(B, S, n_heads, d_kv).transpose(0, 2, 1, 3)
    v = v.reshape(B, S, n_heads, d_kv).transpose(0, 2, 1, 3)
    scores = jnp.einsum("bhqd,bhkd->bhqk", q, k, preferred_element_type=f32)
    scores = scores + pos_bias[None].astype(f32)
    w = jax.nn.softmax(scores, axis=-1)
    ctx = jnp.einsum("bhqk,bhkd->bhqd", w.astype(bf), v, preferred_element_type=f32)
    ctx = ctx.transpose(0, 2, 1, 3).reshape(B, S, inner)
    attn = jnp.dot(ctx.astype(bf), params["wo"].astype(bf), preferred_element_type=f32)
    hidden = hidden + attn
    nx2 = rms(hidden, params["ln2_w"]).astype(bf)
    hff = jnp.maximum(jnp.dot(nx2, params["wi"].astype(bf),
                              preferred_element_type=f32), 0.0)
    y = jnp.dot(hff.astype(bf), params["wo_ff"].astype(bf), preferred_element_type=f32)
    return hidden + y


# ----------------------------------- main -------------------------------------

if __name__ == "__main__":
    B, S = 2, 256
    d_model, n_heads, d_kv, d_ff = 128, 4, 32, 256
    num_buckets = 32
    inner = n_heads * d_kv

    key = jax.random.PRNGKey(0)
    ks = jax.random.split(key, 10)
    scale = 0.05
    hidden = jax.random.normal(ks[0], (B, S, d_model), jnp.float32)
    params = {
        "ln1_w": 1.0 + 0.1 * jax.random.normal(ks[8], (1, d_model), jnp.float32),
        "ln2_w": 1.0 + 0.1 * jax.random.normal(ks[9], (1, d_model), jnp.float32),
        "wq": scale * jax.random.normal(ks[1], (d_model, inner), jnp.float32),
        "wk": scale * jax.random.normal(ks[2], (d_model, inner), jnp.float32),
        "wv": scale * jax.random.normal(ks[3], (d_model, inner), jnp.float32),
        "wo": scale * jax.random.normal(ks[4], (inner, d_model), jnp.float32),
        "wi": scale * jax.random.normal(ks[5], (d_model, d_ff), jnp.float32),
        "wo_ff": scale * jax.random.normal(ks[6], (d_ff, d_model), jnp.float32),
        "rel_emb": scale * jax.random.normal(ks[7], (num_buckets, n_heads), jnp.float32),
    }

    out, pos_bias = t5_block_forward(hidden, params, n_heads=n_heads, d_kv=d_kv,
                                     num_buckets=num_buckets)
    out = jax.block_until_ready(out)

    ref = _reference(hidden, params, pos_bias, n_heads=n_heads, d_kv=d_kv)
    assert out.shape == (B, S, d_model)
    max_err = float(jnp.max(jnp.abs(out - ref)))
    assert jnp.allclose(out, ref, atol=2e-2, rtol=2e-2), (
        f"mismatch vs pure-JAX reference, max abs err = {max_err}")

    print("KERNEL_OK")
</pallas_src>

<mosaic_0001>
module attributes {stable_mosaic.version = 11 : i64} {
  func.func @_qkv_proj_kernel(%arg0: i32, %arg1: i32, %arg2: memref<1x128x128xf32, #tpu.memory_space<vmem>>, %arg3: memref<1x128xf32, #tpu.memory_space<vmem>>, %arg4: memref<128x128xbf16, #tpu.memory_space<vmem>>, %arg5: memref<128x128xbf16, #tpu.memory_space<vmem>>, %arg6: memref<128x128xbf16, #tpu.memory_space<vmem>>, %arg7: memref<1x128x128xbf16, #tpu.memory_space<vmem>>, %arg8: memref<1x128x128xbf16, #tpu.memory_space<vmem>>, %arg9: memref<1x128x128xbf16, #tpu.memory_space<vmem>>) attributes {dimension_semantics = [#tpu.dimension_semantics<parallel>, #tpu.dimension_semantics<parallel>], iteration_bounds = array<i64: 2, 2>, scalar_prefetch = 0 : i64, scratch_operands = 0 : i64, tpu.core_type = #tpu.core_type<tc>, window_params = [{transform_indices = @transform_0, window_bounds = array<i64: 1, 128, 128>}, {pipeline_mode = #tpu.pipeline_mode<synchronous>, transform_indices = @transform_1, window_bounds = array<i64: 1, 128>}, {pipeline_mode = #tpu.pipeline_mode<synchronous>, transform_indices = @transform_2, window_bounds = array<i64: 128, 128>}, {pipeline_mode = #tpu.pipeline_mode<synchronous>, transform_indices = @transform_3, window_bounds = array<i64: 128, 128>}, {pipeline_mode = #tpu.pipeline_mode<synchronous>, transform_indices = @transform_4, window_bounds = array<i64: 128, 128>}, {transform_indices = @transform_5, window_bounds = array<i64: 1, 128, 128>}, {transform_indices = @transform_6, window_bounds = array<i64: 1, 128, 128>}, {transform_indices = @transform_7, window_bounds = array<i64: 1, 128, 128>}]} {
    %c0 = arith.constant 0 : index
    %c0_0 = arith.constant 0 : index
    %c0_1 = arith.constant 0 : index
    %0 = vector.load %arg2[%c0, %c0_0, %c0_1] : memref<1x128x128xf32, #tpu.memory_space<vmem>>, vector<1x128x128xf32>
    %1 = vector.shape_cast %0 : vector<1x128x128xf32> to vector<128x128xf32>
    %c0_2 = arith.constant 0 : index
    %c0_3 = arith.constant 0 : index
    %2 = vector.load %arg3[%c0_2, %c0_3] : memref<1x128xf32, #tpu.memory_space<vmem>>, vector<1x128xf32>
    %3 = vector.shape_cast %2 : vector<1x128xf32> to vector<128xf32>
    %4 = arith.mulf %1, %1 : vector<128x128xf32>
    %cst = arith.constant dense<0.000000e+00> : vector<128xf32>
    %5 = vector.multi_reduction <add>, %4, %cst [1] : vector<128x128xf32> to vector<128xf32>
    %6 = vector.shape_cast %5 : vector<128xf32> to vector<128x1xf32>
    %cst_4 = arith.constant 1.280000e+02 : f32
    %7 = vector.broadcast %cst_4 : f32 to vector<128x1xf32>
    %8 = arith.divf %6, %7 : vector<128x1xf32>
    %cst_5 = arith.constant 9.99999997E-7 : f32
    %9 = vector.broadcast %cst_5 : f32 to vector<128x1xf32>
    %10 = arith.addf %8, %9 : vector<128x1xf32>
    %11 = math.rsqrt %10 : vector<128x1xf32>
    %12 = vector.broadcast %11 : vector<128x1xf32> to vector<128x128xf32>
    %13 = arith.mulf %1, %12 : vector<128x128xf32>
    %14 = vector.shape_cast %3 : vector<128xf32> to vector<1x128xf32>
    %15 = vector.broadcast %14 : vector<1x128xf32> to vector<128x128xf32>
    %16 = arith.mulf %13, %15 : vector<128x128xf32>
    %17 = arith.truncf %16 : vector<128x128xf32> to vector<128x128xbf16>
    %c0_6 = arith.constant 0 : index
    %c0_7 = arith.constant 0 : index
    %18 = vector.load %arg4[%c0_6, %c0_7] : memref<128x128xbf16, #tpu.memory_space<vmem>>, vector<128x128xbf16>
    %cst_8 = arith.constant dense<0.000000e+00> : vector<128x128xf32>
    %19 = tpu.matmul %17, %18, %cst_8 {dimension_numbers = #tpu.dot_dimension_numbers<[1], [0], [0], [1], [0, 0, 1, 1], [], []>} : vector<128x128xbf16>, vector<128x128xbf16>, vector<128x128xf32> -> vector<128x128xf32>
    %20 = arith.truncf %19 : vector<128x128xf32> to vector<128x128xbf16>
    %c0_9 = arith.constant 0 : index
    %c0_10 = arith.constant 0 : index
    %c0_11 = arith.constant 0 : index
    %21 = vector.load %arg7[%c0_9, %c0_10, %c0_11] : memref<1x128x128xbf16, #tpu.memory_space<vmem>>, vector<1x128x128xbf16>
    %22 = vector.shape_cast %21 : vector<1x128x128xbf16> to vector<128x128xbf16>
    %23 = vector.shape_cast %20 : vector<128x128xbf16> to vector<1x128x128xbf16>
    tpu.vector_store %arg7[%c0_9, %c0_10, %c0_11], %23 {strides = array<i32>} : memref<1x128x128xbf16, #tpu.memory_space<vmem>>, vector<1x128x128xbf16>,
    %c0_12 = arith.constant 0 : index
    %c0_13 = arith.constant 0 : index
    %24 = vector.load %arg5[%c0_12, %c0_13] : memref<128x128xbf16, #tpu.memory_space<vmem>>, vector<128x128xbf16>
    %cst_14 = arith.constant dense<0.000000e+00> : vector<128x128xf32>
    %25 = tpu.matmul %17, %24, %cst_14 {dimension_numbers = #tpu.dot_dimension_numbers<[1], [0], [0], [1], [0, 0, 1, 1], [], []>} : vector<128x128xbf16>, vector<128x128xbf16>, vector<128x128xf32> -> vector<128x128xf32>
    %26 = arith.truncf %25 : vector<128x128xf32> to vector<128x128xbf16>
    %c0_15 = arith.constant 0 : index
    %c0_16 = arith.constant 0 : index
    %c0_17 = arith.constant 0 : index
    %27 = vector.load %arg8[%c0_15, %c0_16, %c0_17] : memref<1x128x128xbf16, #tpu.memory_space<vmem>>, vector<1x128x128xbf16>
    %28 = vector.shape_cast %27 : vector<1x128x128xbf16> to vector<128x128xbf16>
    %29 = vector.shape_cast %26 : vector<128x128xbf16> to vector<1x128x128xbf16>
    tpu.vector_store %arg8[%c0_15, %c0_16, %c0_17], %29 {strides = array<i32>} : memref<1x128x128xbf16, #tpu.memory_space<vmem>>, vector<1x128x128xbf16>,
    %c0_18 = arith.constant 0 : index
    %c0_19 = arith.constant 0 : index
    %30 = vector.load %arg6[%c0_18, %c0_19] : memref<128x128xbf16, #tpu.memory_space<vmem>>, vector<128x128xbf16>
    %cst_20 = arith.constant dense<0.000000e+00> : vector<128x128xf32>
    %31 = tpu.matmul %17, %30, %cst_20 {dimension_numbers = #tpu.dot_dimension_numbers<[1], [0], [0], [1], [0, 0, 1, 1], [], []>} : vector<128x128xbf16>, vector<128x128xbf16>, vector<128x128xf32> -> vector<128x128xf32>
    %32 = arith.truncf %31 : vector<128x128xf32> to vector<128x128xbf16>
    %c0_21 = arith.constant 0 : index
    %c0_22 = arith.constant 0 : index
    %c0_23 = arith.constant 0 : index
    %33 = vector.load %arg9[%c0_21, %c0_22, %c0_23] : memref<1x128x128xbf16, #tpu.memory_space<vmem>>, vector<1x128x128xbf16>
    %34 = vector.shape_cast %33 : vector<1x128x128xbf16> to vector<128x128xbf16>
    %35 = vector.shape_cast %32 : vector<128x128xbf16> to vector<1x128x128xbf16>
    tpu.vector_store %arg9[%c0_21, %c0_22, %c0_23], %35 {strides = array<i32>} : memref<1x128x128xbf16, #tpu.memory_space<vmem>>, vector<1x128x128xbf16>,
    return
  }
  func.func @transform_0(%arg0: i32, %arg1: i32) -> (i32, i32, i32) {
    %c0_i32 = arith.constant 0 : i32
    %c0_i32_0 = arith.constant 0 : i32
    return %arg0, %arg1, %c0_i32 : i32, i32, i32
  }
  func.func @transform_1(%arg0: i32, %arg1: i32) -> (i32, i32) {
    %c0_i32 = arith.constant 0 : i32
    %c0_i32_0 = arith.constant 0 : i32
    %c0_i32_1 = arith.constant 0 : i32
    return %c0_i32, %c0_i32_0 : i32, i32
  }
  func.func @transform_2(%arg0: i32, %arg1: i32) -> (i32, i32) {
    %c0_i32 = arith.constant 0 : i32
    %c0_i32_0 = arith.constant 0 : i32
    %c0_i32_1 = arith.constant 0 : i32
    return %c0_i32, %c0_i32_0 : i32, i32
  }
  func.func @transform_3(%arg0: i32, %arg1: i32) -> (i32, i32) {
    %c0_i32 = arith.constant 0 : i32
    %c0_i32_0 = arith.constant 0 : i32
    %c0_i32_1 = arith.constant 0 : i32
    return %c0_i32, %c0_i32_0 : i32, i32
  }
  func.func @transform_4(%arg0: i32, %arg1: i32) -> (i32, i32) {
    %c0_i32 = arith.constant 0 : i32
    %c0_i32_0 = arith.constant 0 : i32
    %c0_i32_1 = arith.constant 0 : i32
    return %c0_i32, %c0_i32_0 : i32, i32
  }
  func.func @transform_5(%arg0: i32, %arg1: i32) -> (i32, i32, i32) {
    %c0_i32 = arith.constant 0 : i32
    %c0_i32_0 = arith.constant 0 : i32
    return %arg0, %arg1, %c0_i32 : i32, i32, i32
  }
  func.func @transform_6(%arg0: i32, %arg1: i32) -> (i32, i32, i32) {
    %c0_i32 = arith.constant 0 : i32
    %c0_i32_0 = arith.constant 0 : i32
    return %arg0, %arg1, %c0_i32 : i32, i32, i32
  }
  func.func @transform_7(%arg0: i32, %arg1: i32) -> (i32, i32, i32) {
    %c0_i32 = arith.constant 0 : i32
    %c0_i32_0 = arith.constant 0 : i32
    return %arg0, %arg1, %c0_i32 : i32, i32, i32
  }
}

</mosaic_0001>

<llo_original>
// kernel: tpu_custom_call.1
$region0: #{tpu_custom_call.1}
  #allocation0 [shape = 'u32[]', space=smem, size = 0x4, offset = 0x4, fixed_abs, tag = 'smem constant byte address 0x4 - core index']
  #allocation1 [shape = 'u32[72,128]{1,0:T(1,128)}', space=vmem, size = 0x9000, scoped, tag = 'internal scratch']
  %s0 = inlined_call_operand.hbm [shape: f32[2,256,128], index: 0, kind: input, shape index: {}]
  %s1 = inlined_call_operand.hbm [shape: f32[1,128], index: 1, kind: input, shape index: {}]
  %s2 = inlined_call_operand.hbm [shape: bf16[128,128], index: 2, kind: input, shape index: {}]
  %s3 = inlined_call_operand.hbm [shape: bf16[128,128], index: 3, kind: input, shape index: {}]
  %s4 = inlined_call_operand.hbm [shape: bf16[128,128], index: 4, kind: input, shape index: {}]
  %s5 = inlined_call_operand.hbm [shape: bf16[2,256,128], index: 5, kind: output, shape index: {0}]
  %s6 = inlined_call_operand.hbm [shape: bf16[2,256,128], index: 6, kind: output, shape index: {1}]
  %s7 = inlined_call_operand.hbm [shape: bf16[2,256,128], index: 7, kind: output, shape index: {2}]
  %8 = xla_tuple %s5, %s6, %s7
  %s9 = sld [smem:[#allocation0]]
  $region89: #{tpu_custom_call.1} parent=0
    _
  %s11 = ssub.s32 1, %s9
  %s12 = scalar_select 0, %s11, %s9
  $region1: #{tpu_custom_call.1} parent=0
    #allocation2 [shape = 'u8[131072]{0}', space=vmem, size = 0x20000, scoped, tag = 'input window, operand 0']
    #allocation3 [shape = 's32[2]{0}', space=sflag, size = 0x8, scoped, tag = 'scoped memory for tpu_custom_call.1']
    #allocation4 [shape = 's32[2]{0}', space=sflag, size = 0x8, scoped, tag = 'scoped memory for tpu_custom_call.1']
    #allocation5 [shape = 'u8[512]{0}', space=vmem, size = 0x400, scoped, tag = 'input window, operand 1, single buffered']
    #allocation6 [shape = 's32[1]{0}', space=sflag, size = 0x4, scoped, tag = 'scoped memory for tpu_custom_call.1']
    #allocation7 [shape = 'u8[32768]{0}', space=vmem, size = 0x8000, scoped, tag = 'input window, operand 2, single buffered']
    #allocation8 [shape = 'u8[32768]{0}', space=vmem, size = 0x8000, scoped, tag = 'input window, operand 3, single buffered']
    #allocation9 [shape = 's32[1]{0}', space=sflag, size = 0x4, scoped, tag = 'scoped memory for tpu_custom_call.1']
    #allocation10 [shape = 'u8[32768]{0}', space=vmem, size = 0x8000, scoped, tag = 'input window, operand 4, single buffered']
    #allocation11 [shape = 'u8[65536]{0}', space=vmem, size = 0x10000, scoped, tag = 'output window, operand 0']
    #allocation12 [shape = 'u8[65536]{0}', space=vmem, size = 0x10000, scoped, tag = 'output window, operand 1']
    #allocation13 [shape = 's32[2]{0}', space=sflag, size = 0x8, scoped, tag = 'scoped memory for tpu_custom_call.1']
    #allocation14 [shape = 'u8[65536]{0}', space=vmem, size = 0x10000, scoped, tag = 'output window, operand 2']
    %13 = vsyncpa [#allocation3], 0
    %s14 = scalar_lea.sflag [#allocation3], 1
    %15 = vsyncpa %s14, 0
    %16 = vsyncpa [#allocation6], 0
    %17 = vsyncpa [#allocation9], 0
    %18 = vsyncpa [#allocation4], 0
    %s19 = scalar_lea.sflag [#allocation4], 1
    %20 = vsyncpa %s19, 0
    %21 = vsyncpa [#allocation13], 0
    %s22 = scalar_lea.sflag [#allocation13], 1
    %23 = vsyncpa %s22, 0
    loop: start=0, step=1, limit=6
    $region2: #{tpu_custom_call.1} parent=1 // loop_pre_header
      _
    $region3: #{tpu_custom_call.1} parent=1 // loop_header
      %s25 = sphi 0, %s29
      %p26 = scmp.ge.s32.totalorder %s25, 6
      %s32 = sphi 0, %s44
      %s33 = sphi 0, %s40
      %s34 = sphi 0, %s32
      %s35 = sphi 0, %s33
      %s36 = sphi 0, %s34
      %s37 = sphi 0, %s35
      %s49 = sphi 0, %s51
      %s52 = sphi 0, %s49
      %s53 = sphi 0, %s52
      %s69 = sphi 0, %s53
      %s73 = sphi 0, %s73
      %s75 = sphi 0, %s73
      %s76 = sphi 0, %s75
      %s90 = sphi 0, %s76
      %s94 = sphi 0, %s94
      %s96 = sphi 0, %s94
      %s97 = sphi 0, %s96
      %s111 = sphi 0, %s97
      %s115 = sphi 0, %s115
      %s117 = sphi 0, %s115
      %s118 = sphi 0, %s117
      %s132 = sphi 0, %s118
      %s136 = sphi 0, %s136
      %s138 = sphi 0, %s136
      %s139 = sphi 0, %s138
      %s153 = sphi 0, %s139
      %s161 = sphi 0, %s163
      %s164 = sphi 0, %s161
      %s165 = sphi 0, %s164
      %s181 = sphi 0, %s165
      %s189 = sphi 0, %s191
      %s192 = sphi 0, %s189
      %s193 = sphi 0, %s192
      %s209 = sphi 0, %s193
      %s217 = sphi 0, %s219
      %s220 = sphi 0, %s217
      %s221 = sphi 0, %s220
      %s237 = sphi 0, %s221
    $region4: #{tpu_custom_call.1} parent=1 // loop_header_branch
      %28 = sbr.rel (%p26) target = $region8
    $region5: #{tpu_custom_call.1} parent=1 // loop_body
      %s30 = ssub.s32 %s25, 1
      %s31 = ssub.s32 %s25, 2
      %s38 = sadd.s32 1, %s33
      %p39 = scmp.ge.s32.totalorder %s38, 2
      %s40 = scalar_select %p39, 0, %s38
      %s41 = sadd.s32 1, %s32
      %s42 = scalar_select %p39, %s41, %s32
      %p43 = scmp.ge.s32.totalorder %s42, 2
      %s44 = scalar_select %p43, 0, %s42
      %s45 = ssub.s32 %s32, %s44
      %s46 = ssub.s32 %s33, %s40
      %s47 = sor.u32 %s45, %s46
      %p48 = scmp.eq.s32.totalorder %s47, 0
      %s50 = sadd.s32 %s49, 1
      %s51 = scalar_select %p48, %s49, %s50
      %p54 = pneg %p48
      %p55 = scmp.eq.s32.totalorder %s25, 3
      %p56 = por %p54, %p55
      %p57 = scmp.ne.s32.totalorder %s49, %s52
      %p58 = scmp.eq.s32.totalorder %s25, 0
      %p59 = por %p57, %p58
      %p60 = scmp.ne.s32.totalorder %s49, %s52
      %p61 = scmp.eq.s32.totalorder %s30, 3
      %p62 = por %p60, %p61
      %p63 = scmp.ne.s32.totalorder %s52, %s53
      %p64 = scmp.eq.s32.totalorder %s30, 0
      %p65 = por %p63, %p64
      %p66 = scmp.ne.s32.totalorder %s52, %s53
      %p67 = scmp.eq.s32.totalorder %s31, 3
      %p68 = por %p66, %p67
      %p70 = scmp.ne.s32.totalorder %s53, %s69
      %p71 = scmp.eq.s32.totalorder %s31, 0
      %p72 = por %p70, %p71
      %s74 = sadd.s32 %s73, 1
      %p77 = scmp.eq.s32.totalorder %s25, 3
      %p78 = scmp.ne.s32.totalorder %s73, %s75
      %p79 = scmp.eq.s32.totalorder %s25, 0
      %p80 = por %p78, %p79
      %p81 = scmp.ne.s32.totalorder %s73, %s75
      %p82 = scmp.eq.s32.totalorder %s30, 3
      %p83 = por %p81, %p82
      %p84 = scmp.ne.s32.totalorder %s75, %s76
      %p85 = scmp.eq.s32.totalorder %s30, 0
      %p86 = por %p84, %p85
      %p87 = scmp.ne.s32.totalorder %s75, %s76
      %p88 = scmp.eq.s32.totalorder %s31, 3
      %p89 = por %p87, %p88
      %p91 = scmp.ne.s32.totalorder %s76, %s90
      %p92 = scmp.eq.s32.totalorder %s31, 0
      %p93 = por %p91, %p92
      %s95 = sadd.s32 %s94, 1
      %p98 = scmp.eq.s32.totalorder %s25, 3
      %p99 = scmp.ne.s32.totalorder %s94, %s96
      %p100 = scmp.eq.s32.totalorder %s25, 0
      %p101 = por %p99, %p100
      %p102 = scmp.ne.s32.totalorder %s94, %s96
      %p103 = scmp.eq.s32.totalorder %s30, 3
      %p104 = por %p102, %p103
      %p105 = scmp.ne.s32.totalorder %s96, %s97
      %p106 = scmp.eq.s32.totalorder %s30, 0
      %p107 = por %p105, %p106
      %p108 = scmp.ne.s32.totalorder %s96, %s97
      %p109 = scmp.eq.s32.totalorder %s31, 3
      %p110 = por %p108, %p109
      %p112 = scmp.ne.s32.totalorder %s97, %s111
      %p113 = scmp.eq.s32.totalorder %s31, 0
      %p114 = por %p112, %p113
      %s116 = sadd.s32 %s115, 1
      %p119 = scmp.eq.s32.totalorder %s25, 3
      %p120 = scmp.ne.s32.totalorder %s115, %s117
      %p121 = scmp.eq.s32.totalorder %s25, 0
      %p122 = por %p120, %p121
      %p123 = scmp.ne.s32.totalorder %s115, %s117
      %p124 = scmp.eq.s32.totalorder %s30, 3
      %p125 = por %p123, %p124
      %p126 = scmp.ne.s32.totalorder %s117, %s118
      %p127 = scmp.eq.s32.totalorder %s30, 0
      %p128 = por %p126, %p127
      %p129 = scmp.ne.s32.totalorder %s117, %s118
      %p130 = scmp.eq.s32.totalorder %s31, 3
      %p131 = por %p129, %p130
      %p133 = scmp.ne.s32.totalorder %s118, %s132
      %p134 = scmp.eq.s32.totalorder %s31, 0
      %p135 = por %p133, %p134
      %s137 = sadd.s32 %s136, 1
      %p140 = scmp.eq.s32.totalorder %s25, 3
      %p141 = scmp.ne.s32.totalorder %s136, %s138
      %p142 = scmp.eq.s32.totalorder %s25, 0
      %p143 = por %p141, %p142
      %p144 = scmp.ne.s32.totalorder %s136, %s138
      %p145 = scmp.eq.s32.totalorder %s30, 3
      %p146 = por %p144, %p145
      %p147 = scmp.ne.s32.totalorder %s138, %s139
      %p148 = scmp.eq.s32.totalorder %s30, 0
      %p149 = por %p147, %p148
      %p150 = scmp.ne.s32.totalorder %s138, %s139
      %p151 = scmp.eq.s32.totalorder %s31, 3
      %p152 = por %p150, %p151
      %p154 = scmp.ne.s32.totalorder %s139, %s153
      %p155 = scmp.eq.s32.totalorder %s31, 0
      %p156 = por %p154, %p155
      %s157 = ssub.s32 %s32, %s44
      %s158 = ssub.s32 %s33, %s40
      %s159 = sor.u32 %s157, %s158
      %p160 = scmp.eq.s32.totalorder %s159, 0
      %s162 = sadd.s32 %s161, 1
      %s163 = scalar_select %p160, %s161, %s162
      %p166 = pneg %p160
      %p167 = scmp.eq.s32.totalorder %s25, 3
      %p168 = por %p166, %p167
      %p169 = scmp.ne.s32.totalorder %s161, %s164
      %p170 = scmp.eq.s32.totalorder %s25, 0
      %p171 = por %p169, %p170
      %p172 = scmp.ne.s32.totalorder %s161, %s164
      %p173 = scmp.eq.s32.totalorder %s30, 3
      %p174 = por %p172, %p173
      %p175 = scmp.ne.s32.totalorder %s164, %s165
      %p176 = scmp.eq.s32.totalorder %s30, 0
      %p177 = por %p175, %p176
      %p178 = scmp.ne.s32.totalorder %s164, %s165
      %p179 = scmp.eq.s32.totalorder %s31, 3
      %p180 = por %p178, %p179
      %p182 = scmp.ne.s32.totalorder %s165, %s181
      %p183 = scmp.eq.s32.totalorder %s31, 0
      %p184 = por %p182, %p183
      %s185 = ssub.s32 %s32, %s44
      %s186 = ssub.s32 %s33, %s40
      %s187 = sor.u32 %s185, %s186
      %p188 = scmp.eq.s32.totalorder %s187, 0
      %s190 = sadd.s32 %s189, 1
      %s191 = scalar_select %p188, %s189, %s190
      %p194 = pneg %p188
      %p195 = scmp.eq.s32.totalorder %s25, 3
      %p196 = por %p194, %p195
      %p197 = scmp.ne.s32.totalorder %s189, %s192
      %p198 = scmp.eq.s32.totalorder %s25, 0
      %p199 = por %p197, %p198
      %p200 = scmp.ne.s32.totalorder %s189, %s192
      %p201 = scmp.eq.s32.totalorder %s30, 3
      %p202 = por %p200, %p201
      %p203 = scmp.ne.s32.totalorder %s192, %s193
      %p204 = scmp.eq.s32.totalorder %s30, 0
      %p205 = por %p203, %p204
      %p206 = scmp.ne.s32.totalorder %s192, %s193
      %p207 = scmp.eq.s32.totalorder %s31, 3
      %p208 = por %p206, %p207
      %p210 = scmp.ne.s32.totalorder %s193, %s209
      %p211 = scmp.eq.s32.totalorder %s31, 0
      %p212 = por %p210, %p211
      %s213 = ssub.s32 %s32, %s44
      %s214 = ssub.s32 %s33, %s40
      %s215 = sor.u32 %s213, %s214
      %p216 = scmp.eq.s32.totalorder %s215, 0
      %s218 = sadd.s32 %s217, 1
      %s219 = scalar_select %p216, %s217, %s218
      %p222 = pneg %p216
      %p223 = scmp.eq.s32.totalorder %s25, 3
      %p224 = por %p222, %p223
      %p225 = scmp.ne.s32.totalorder %s217, %s220
      %p226 = scmp.eq.s32.totalorder %s25, 0
      %p227 = por %p225, %p226
      %p228 = scmp.ne.s32.totalorder %s217, %s220
      %p229 = scmp.eq.s32.totalorder %s30, 3
      %p230 = por %p228, %p229
      %p231 = scmp.ne.s32.totalorder %s220, %s221
      %p232 = scmp.eq.s32.totalorder %s30, 0
      %p233 = por %p231, %p232
      %p234 = scmp.ne.s32.totalorder %s220, %s221
      %p235 = scmp.eq.s32.totalorder %s31, 3
      %p236 = por %p234, %p235
      %p238 = scmp.ne.s32.totalorder %s221, %s237
      %p239 = scmp.eq.s32.totalorder %s31, 0
      %p240 = por %p238, %p239
      %p241 = scmp.le.s32.totalorder 1, %s25
      %p242 = scmp.lt.s32.totalorder %s25, 5
      %p243 = pnand %p241, %p242
      %p244 = pneg %p243
      // Predicated region
      $region9: #{tpu_custom_call.1} parent=5 // pred_check
        _
      $region10: #{tpu_custom_call.1} parent=5 // pred_check_branch
        %246 = sbr.rel (%p243) target = $region12
      $region11: #{tpu_custom_call.1} parent=5 // pred_region
        %s247 = ssub.s32 %s25, 1
        // Predicated region
        $region13: #{tpu_custom_call.1} parent=11 // pred_check
          %p248 = pneg %p86
        $region14: #{tpu_custom_call.1} parent=11 // pred_check_branch
          %250 = sbr.rel (%p248) target = $region16
        $region15: #{tpu_custom_call.1} parent=11 // pred_region
          %252 = vsyncadd [#allocation6], 0
          %s254 = sshll.u32 %s1, 4
          %s255 = int_to_ptr.hbm [resolvable:$true] %s254
          %s256 = sshll.u32 [#allocation5], 4
          %s257 = int_to_ptr.vmem [resolvable:$true] %s256
          %259 = dma.hbm_to_vmem [thread:$0]  %s255, 16, %s257, [#allocation6]
        $region16: #{tpu_custom_call.1} parent=11 // pred_fallthru
          _
        // Predicated region
        $region17: #{tpu_custom_call.1} parent=11 // pred_check
          %p260 = pneg %p107
        $region18: #{tpu_custom_call.1} parent=11 // pred_check_branch
          %262 = sbr.rel (%p260) target = $region20
        $region19: #{tpu_custom_call.1} parent=11 // pred_region
          %264 = vsyncadd [#allocation6], 0
          %s265 = sshll.u32 %s2, 4
          %s266 = int_to_ptr.hbm [resolvable:$true] %s265
          %s267 = sshll.u32 [#allocation7], 4
          %s268 = int_to_ptr.vmem [resolvable:$true] %s267
          %273 = dma.hbm_to_vmem [thread:$0]  %s266, 1024, %s268, [#allocation6], 64, 64, 4
        $region20: #{tpu_custom_call.1} parent=11 // pred_fallthru
          _
        // Predicated region
        $region21: #{tpu_custom_call.1} parent=11 // pred_check
          %p274 = pneg %p128
        $region22: #{tpu_custom_call.1} parent=11 // pred_check_branch
          %276 = sbr.rel (%p274) target = $region24
        $region23: #{tpu_custom_call.1} parent=11 // pred_region
          %278 = vsyncadd [#allocation9], 0
          %s279 = sshll.u32 %s3, 4
          %s280 = int_to_ptr.hbm [resolvable:$true] %s279
          %s281 = sshll.u32 [#allocation8], 4
          %s282 = int_to_ptr.vmem [resolvable:$true] %s281
          %287 = dma.hbm_to_vmem [thread:$0]  %s280, 1024, %s282, [#allocation9], 64, 64, 4
        $region24: #{tpu_custom_call.1} parent=11 // pred_fallthru
          _
        // Predicated region
        $region25: #{tpu_custom_call.1} parent=11 // pred_check
          %p288 = pneg %p149
        $region26: #{tpu_custom_call.1} parent=11 // pred_check_branch
          %290 = sbr.rel (%p288) target = $region28
        $region27: #{tpu_custom_call.1} parent=11 // pred_region
          %292 = vsyncadd [#allocation9], 0
          %s293 = sshll.u32 %s4, 4
          %s294 = int_to_ptr.hbm [resolvable:$true] %s293
          %s295 = sshll.u32 [#allocation10], 4
          %s296 = int_to_ptr.vmem [resolvable:$true] %s295
          %301 = dma.hbm_to_vmem [thread:$0]  %s294, 1024, %s296, [#allocation9], 64, 64, 4
        $region28: #{tpu_custom_call.1} parent=11 // pred_fallthru
          _
      $region12: #{tpu_custom_call.1} parent=5 // pred_fallthru
        _
      %p302 = scmp.lt.s32.totalorder %s25, 4
      // Predicated region
      $region29: #{tpu_custom_call.1} parent=5 // pred_check
        %p303 = pneg %p302
      $region30: #{tpu_custom_call.1} parent=5 // pred_check_branch
        %305 = sbr.rel (%p303) target = $region32
      $region31: #{tpu_custom_call.1} parent=5 // pred_region
        // Predicated region
        $region33: #{tpu_custom_call.1} parent=31 // pred_check
          %p306 = pneg %p59
        $region34: #{tpu_custom_call.1} parent=31 // pred_check_branch
          %308 = sbr.rel (%p306) target = $region36
        $region35: #{tpu_custom_call.1} parent=31 // pred_region
          %s309 = sand.u32 %s49, 1
          %s310 = scalar_lea.sflag [#allocation3], %s309
          %s311 = sand.u32 %s49, 1
          %s312 = smul.addr %s311, 128
          %s313 = scalar_lea.vmem [#allocation2], %s312
          %s314 = smul.u32 16, %s33
          %316 = vsyncadd %s310, 0
          %s317 = smul.addr %s32, 32
          %s318 = sadd.s32 %s314, %s317
          %s319 = smul.addr %s318, 8
          %s320 = scalar_lea.hbm %s0, %s319
          %s321 = sshll.u32 %s320, 4
          %s322 = int_to_ptr.hbm [resolvable:$true] %s321
          %s323 = sshll.u32 %s313, 4
          %s324 = int_to_ptr.vmem [resolvable:$true] %s323
          %329 = dma.hbm_to_vmem [thread:$0]  %s322, 2048, %s324, %s310, 128, 128, 8
        $region36: #{tpu_custom_call.1} parent=31 // pred_fallthru
          _
      $region32: #{tpu_custom_call.1} parent=5 // pred_fallthru
        _
      %p330 = scmp.le.s32.totalorder 1, %s25
      %p331 = scmp.lt.s32.totalorder %s25, 5
      %p332 = pnand %p330, %p331
      %p333 = pneg %p332
      // Predicated region
      $region37: #{tpu_custom_call.1} parent=5 // pred_check
        _
      $region38: #{tpu_custom_call.1} parent=5 // pred_check_branch
        %335 = sbr.rel (%p332) target = $region40
      $region39: #{tpu_custom_call.1} parent=5 // pred_region
        %s336 = ssub.s32 %s25, 1
        %s337 = sand.u32 %s52, 1
        %s338 = scalar_lea.sflag [#allocation3], %s337
        %s339 = sand.u32 %s52, 1
        %s340 = smul.addr %s339, 128
        %s341 = scalar_lea.vmem [#allocation2], %s340
        // Predicated region
        $region41: #{tpu_custom_call.1} parent=39 // pred_check
          %p342 = pneg %p65
        $region42: #{tpu_custom_call.1} parent=39 // pred_check_branch
          %344 = sbr.rel (%p342) target = $region44
        $region43: #{tpu_custom_call.1} parent=39 // pred_region
          %346 = dma.done %s338, 2048
        $region44: #{tpu_custom_call.1} parent=39 // pred_fallthru
          _
        // Predicated region
        $region45: #{tpu_custom_call.1} parent=39 // pred_check
          %p347 = pneg %p86
        $region46: #{tpu_custom_call.1} parent=39 // pred_check_branch
          %349 = sbr.rel (%p347) target = $region48
        $region47: #{tpu_custom_call.1} parent=39 // pred_region
          %351 = dma.done [#allocation6], 16
        $region48: #{tpu_custom_call.1} parent=39 // pred_fallthru
          _
        // Predicated region
        $region49: #{tpu_custom_call.1} parent=39 // pred_check
          %p352 = pneg %p107
        $region50: #{tpu_custom_call.1} parent=39 // pred_check_branch
          %354 = sbr.rel (%p352) target = $region52
        $region51: #{tpu_custom_call.1} parent=39 // pred_region
          %356 = dma.done [#allocation6], 1024
        $region52: #{tpu_custom_call.1} parent=39 // pred_fallthru
          _
        // Predicated region
        $region53: #{tpu_custom_call.1} parent=39 // pred_check
          %p357 = pneg %p128
        $region54: #{tpu_custom_call.1} parent=39 // pred_check_branch
          %359 = sbr.rel (%p357) target = $region56
        $region55: #{tpu_custom_call.1} parent=39 // pred_region
          %361 = dma.done [#allocation9], 1024
        $region56: #{tpu_custom_call.1} parent=39 // pred_fallthru
          _
        // Predicated region
        $region57: #{tpu_custom_call.1} parent=39 // pred_check
          %p362 = pneg %p149
        $region58: #{tpu_custom_call.1} parent=39 // pred_check_branch
          %364 = sbr.rel (%p362) target = $region60
        $region59: #{tpu_custom_call.1} parent=39 // pred_region
          %366 = dma.done [#allocation9], 1024
        $region60: #{tpu_custom_call.1} parent=39 // pred_fallthru
          _
        %s367 = sand.u32 %s52, 1
        %s368 = scalar_lea.sflag [#allocation3], %s367
        %s369 = sand.u32 %s52, 1
        %s370 = smul.addr %s369, 128
        %s371 = scalar_lea.vmem [#allocation2], %s370
        %p372 = pneg %p65
        %p373 = pneg %p62
        %p374 = pneg %p86
        %p375 = pneg %p83
        %p376 = pneg %p107
        %p377 = pneg %p104
        %p378 = pneg %p128
        %p379 = pneg %p125
        %p380 = pneg %p149
        %p381 = pneg %p146
        %p382 = pneg %p177
        %p383 = pneg %p174
        %s384 = sand.u32 %s164, 1
        %s385 = scalar_lea.sflag [#allocation4], %s384
        %s386 = sand.u32 %s164, 1
        %s387 = smul.addr %s386, 64
        %s388 = scalar_lea.vmem [#allocation11], %s387
        %p389 = pneg %p205
        %p390 = pneg %p202
        %s391 = sand.u32 %s30, 1
        %s392 = scalar_lea.sflag [#allocation13], %s391
        %s393 = sand.u32 %s192, 1
        %s394 = smul.addr %s393, 64
        %s395 = scalar_lea.vmem [#allocation12], %s394
        %p396 = pneg %p233
        %p397 = pneg %p230
        %s398 = sand.u32 %s30, 1
        %s399 = scalar_lea.sflag [#allocation13], %s398
        %s400 = sand.u32 %s220, 1
        %s401 = smul.addr %s400, 64
        %s402 = scalar_lea.vmem [#allocation14], %s401
        %s403 = smul.u32 16, %s35
        %s404 = smul.u32 16, %s35
        %s405 = smul.u32 16, %s35
        %s406 = smul.u32 16, %s35
        %v407 = vld [vmem:[%s341] sm:$0xff]
        %v408 = vld [vmem:[%s341 + $0x8] sm:$0xff]
        %v409 = vld [vmem:[%s341 + $0x10] sm:$0xff]
        %v410 = vld [vmem:[%s341 + $0x18] sm:$0xff]
        %v411 = vld [vmem:[%s341 + $0x20] sm:$0xff]
        %v412 = vld [vmem:[%s341 + $0x28] sm:$0xff]
        %v413 = vld [vmem:[%s341 + $0x30] sm:$0xff]
        %v414 = vld [vmem:[%s341 + $0x38] sm:$0xff]
        %v415 = vld [vmem:[%s341 + $0x40] sm:$0xff]
        %v416 = vld [vmem:[%s341 + $0x48] sm:$0xff]
        %v417 = vld [vmem:[%s341 + $0x50] sm:$0xff]
        %v418 = vld [vmem:[%s341 + $0x58] sm:$0xff]
        %v419 = vld [vmem:[%s341 + $0x60] sm:$0xff]
        %v420 = vld [vmem:[%s341 + $0x68] sm:$0xff]
        %v421 = vld [vmem:[%s341 + $0x70] sm:$0xff]
        %v422 = vld [vmem:[%s341 + $0x78] sm:$0xff]
        %v423 = vld [vmem:[#allocation5] sm:$0x1]
        %v424 = vmul.f32 %v407, %v407
        %v425 = vmul.f32 %v408, %v408
        %v426 = vmul.f32 %v409, %v409
        %v427 = vmul.f32 %v410, %v410
        %v428 = vmul.f32 %v411, %v411
        %v429 = vmul.f32 %v412, %v412
        %v430 = vmul.f32 %v413, %v413
        %v431 = vmul.f32 %v414, %v414
        %v432 = vmul.f32 %v415, %v415
        %v433 = vmul.f32 %v416, %v416
        %v434 = vmul.f32 %v417, %v417
        %v435 = vmul.f32 %v418, %v418
        %v436 = vmul.f32 %v419, %v419
        %v437 = vmul.f32 %v420, %v420
        %v438 = vmul.f32 %v421, %v421
        %v439 = vmul.f32 %v422, %v422
        %440 = vadd.xlane.f32.xlu0 %v424
        %v441 = vpop.xlane.xlu0 %440
        %442 = vadd.xlane.f32.xlu0 %v425
        %v443 = vpop.xlane.xlu0 %442
        %444 = vadd.xlane.f32.xlu0 %v426
        %v445 = vpop.xlane.xlu0 %444
        %446 = vadd.xlane.f32.xlu0 %v427
        %v447 = vpop.xlane.xlu0 %446
        %448 = vadd.xlane.f32.xlu0 %v428
        %v449 = vpop.xlane.xlu0 %448
        %450 = vadd.xlane.f32.xlu0 %v429
        %v451 = vpop.xlane.xlu0 %450
        %452 = vadd.xlane.f32.xlu0 %v430
        %v453 = vpop.xlane.xlu0 %452
        %454 = vadd.xlane.f32.xlu0 %v431
        %v455 = vpop.xlane.xlu0 %454
        %456 = vadd.xlane.f32.xlu0 %v432
        %v457 = vpop.xlane.xlu0 %456
        %458 = vadd.xlane.f32.xlu0 %v433
        %v459 = vpop.xlane.xlu0 %458
        %460 = vadd.xlane.f32.xlu0 %v434
        %v461 = vpop.xlane.xlu0 %460
        %462 = vadd.xlane.f32.xlu0 %v435
        %v463 = vpop.xlane.xlu0 %462
        %464 = vadd.xlane.f32.xlu0 %v436
        %v465 = vpop.xlane.xlu0 %464
        %466 = vadd.xlane.f32.xlu0 %v437
        %v467 = vpop.xlane.xlu0 %466
        %468 = vadd.xlane.f32.xlu0 %v438
        %v469 = vpop.xlane.xlu0 %468
        %470 = vadd.xlane.f32.xlu0 %v439
        %v471 = vpop.xlane.xlu0 %470
        %v472 = vrcp.pop 128.0
        %v473 = vmul.f32 128.0, %v472
        %v474 = vsub.f32 1.0, %v473
        %v475 = vmul.f32 %v472, %v474
        %v476 = vadd.f32 %v472, %v475
        %vm477 = vweird.f32 %v472
        %v478 = vsel %vm477, %v472, %v476
        %v479 = vmul.f32 %v441, %v478
        %v480 = vmul.f32 %v443, %v478
        %v481 = vmul.f32 %v445, %v478
        %v482 = vmul.f32 %v447, %v478
        %v483 = vmul.f32 %v449, %v478
        %v484 = vmul.f32 %v451, %v478
        %v485 = vmul.f32 %v453, %v478
        %v486 = vmul.f32 %v455, %v478
        %v487 = vmul.f32 %v457, %v478
        %v488 = vmul.f32 %v459, %v478
        %v489 = vmul.f32 %v461, %v478
        %v490 = vmul.f32 %v463, %v478
        %v491 = vmul.f32 %v465, %v478
        %v492 = vmul.f32 %v467, %v478
        %v493 = vmul.f32 %v469, %v478
        %v494 = vmul.f32 %v471, %v478
        %v495 = vadd.f32 %v479, 1e-06
        %v496 = vadd.f32 %v480, 1e-06
        %v497 = vadd.f32 %v481, 1e-06
        %v498 = vadd.f32 %v482, 1e-06
        %v499 = vadd.f32 %v483, 1e-06
        %v500 = vadd.f32 %v484, 1e-06
        %v501 = vadd.f32 %v485, 1e-06
        %v502 = vadd.f32 %v486, 1e-06
        %v503 = vadd.f32 %v487, 1e-06
        %v504 = vadd.f32 %v488, 1e-06
        %v505 = vadd.f32 %v489, 1e-06
        %v506 = vadd.f32 %v490, 1e-06
        %v507 = vadd.f32 %v491, 1e-06
        %v508 = vadd.f32 %v492, 1e-06
        %v509 = vadd.f32 %v493, 1e-06
        %v510 = vadd.f32 %v494, 1e-06
        %v511 = vrsqrt.pop %v495
        %v512 = vmul.f32 %v511, %v495
        %v513 = vmul.f32 %v512, %v511
        %v514 = vmul.f32 0.5, %v513
        %v515 = vsub.f32 1.5, %v514
        %v516 = vmul.f32 %v511, %v515
        %vm517 = vweird.f32 %v495
        %vm518 = vweird.f32 %v511
        %vm519 = vmor %vm517, %vm518
        %v520 = vsel %vm519, %v511, %v516
        %v521 = vrsqrt.pop %v496
        %v522 = vmul.f32 %v521, %v496
        %v523 = vmul.f32 %v522, %v521
        %v524 = vmul.f32 0.5, %v523
        %v525 = vsub.f32 1.5, %v524
        %v526 = vmul.f32 %v521, %v525
        %vm527 = vweird.f32 %v496
        %vm528 = vweird.f32 %v521
        %vm529 = vmor %vm527, %vm528
        %v530 = vsel %vm529, %v521, %v526
        %v531 = vrsqrt.pop %v497
        %v532 = vmul.f32 %v531, %v497
        %v533 = vmul.f32 %v532, %v531
        %v534 = vmul.f32 0.5, %v533
        %v535 = vsub.f32 1.5, %v534
        %v536 = vmul.f32 %v531, %v535
        %vm537 = vweird.f32 %v497
        %vm538 = vweird.f32 %v531
        %vm539 = vmor %vm537, %vm538
        %v540 = vsel %vm539, %v531, %v536
        %v541 = vrsqrt.pop %v498
        %v542 = vmul.f32 %v541, %v498
        %v543 = vmul.f32 %v542, %v541
        %v544 = vmul.f32 0.5, %v543
        %v545 = vsub.f32 1.5, %v544
        %v546 = vmul.f32 %v541, %v545
        %vm547 = vweird.f32 %v498
        %vm548 = vweird.f32 %v541
        %vm549 = vmor %vm547, %vm548
        %v550 = vsel %vm549, %v541, %v546
        %v551 = vrsqrt.pop %v499
        %v552 = vmul.f32 %v551, %v499
        %v553 = vmul.f32 %v552, %v551
        %v554 = vmul.f32 0.5, %v553
        %v555 = vsub.f32 1.5, %v554
        %v556 = vmul.f32 %v551, %v555
        %vm557 = vweird.f32 %v499
        %vm558 = vweird.f32 %v551
        %vm559 = vmor %vm557, %vm558
        %v560 = vsel %vm559, %v551, %v556
        %v561 = vrsqrt.pop %v500
        %v562 = vmul.f32 %v561, %v500
        %v563 = vmul.f32 %v562, %v561
        %v564 = vmul.f32 0.5, %v563
        %v565 = vsub.f32 1.5, %v564
        %v566 = vmul.f32 %v561, %v565
        %vm567 = vweird.f32 %v500
        %vm568 = vweird.f32 %v561
        %vm569 = vmor %vm567, %vm568
        %v570 = vsel %vm569, %v561, %v566
        %v571 = vrsqrt.pop %v501
        %v572 = vmul.f32 %v571, %v501
        %v573 = vmul.f32 %v572, %v571
        %v574 = vmul.f32 0.5, %v573
        %v575 = vsub.f32 1.5, %v574
        %v576 = vmul.f32 %v571, %v575
        %vm577 = vweird.f32 %v501
        %vm578 = vweird.f32 %v571
        %vm579 = vmor %vm577, %vm578
        %v580 = vsel %vm579, %v571, %v576
        %v581 = vrsqrt.pop %v502
        %v582 = vmul.f32 %v581, %v502
        %v583 = vmul.f32 %v582, %v581
        %v584 = vmul.f32 0.5, %v583
        %v585 = vsub.f32 1.5, %v584
        %v586 = vmul.f32 %v581, %v585
        %vm587 = vweird.f32 %v502
        %vm588 = vweird.f32 %v581
        %vm589 = vmor %vm587, %vm588
        %v590 = vsel %vm589, %v581, %v586
        %v591 = vrsqrt.pop %v503
        %v592 = vmul.f32 %v591, %v503
        %v593 = vmul.f32 %v592, %v591
        %v594 = vmul.f32 0.5, %v593
        %v595 = vsub.f32 1.5, %v594
        %v596 = vmul.f32 %v591, %v595
        %vm597 = vweird.f32 %v503
        %vm598 = vweird.f32 %v591
        %vm599 = vmor %vm597, %vm598
        %v600 = vsel %vm599, %v591, %v596
        %v601 = vrsqrt.pop %v504
        %v602 = vmul.f32 %v601, %v504
        %v603 = vmul.f32 %v602, %v601
        %v604 = vmul.f32 0.5, %v603
        %v605 = vsub.f32 1.5, %v604
        %v606 = vmul.f32 %v601, %v605
        %vm607 = vweird.f32 %v504
        %vm608 = vweird.f32 %v601
        %vm609 = vmor %vm607, %vm608
        %v610 = vsel %vm609, %v601, %v606
        %v611 = vrsqrt.pop %v505
        %v612 = vmul.f32 %v611, %v505
        %v613 = vmul.f32 %v612, %v611
        %v614 = vmul.f32 0.5, %v613
        %v615 = vsub.f32 1.5, %v614
        %v616 = vmul.f32 %v611, %v615
        %vm617 = vweird.f32 %v505
        %vm618 = vweird.f32 %v611
        %vm619 = vmor %vm617, %vm618
        %v620 = vsel %vm619, %v611, %v616
        %v621 = vrsqrt.pop %v506
        %v622 = vmul.f32 %v621, %v506
        %v623 = vmul.f32 %v622, %v621
        %v624 = vmul.f32 0.5, %v623
        %v625 = vsub.f32 1.5, %v624
        %v626 = vmul.f32 %v621, %v625
        %vm627 = vweird.f32 %v506
        %vm628 = vweird.f32 %v621
        %vm629 = vmor %vm627, %vm628
        %v630 = vsel %vm629, %v621, %v626
        %v631 = vrsqrt.pop %v507
        %v632 = vmul.f32 %v631, %v507
        %v633 = vmul.f32 %v632, %v631
        %v634 = vmul.f32 0.5, %v633
        %v635 = vsub.f32 1.5, %v634
        %v636 = vmul.f32 %v631, %v635
        %vm637 = vweird.f32 %v507
        %vm638 = vweird.f32 %v631
        %vm639 = vmor %vm637, %vm638
        %v640 = vsel %vm639, %v631, %v636
        %v641 = vrsqrt.pop %v508
        %v642 = vmul.f32 %v641, %v508
        %v643 = vmul.f32 %v642, %v641
        %v644 = vmul.f32 0.5, %v643
        %v645 = vsub.f32 1.5, %v644
        %v646 = vmul.f32 %v641, %v645
        %vm647 = vweird.f32 %v508
        %vm648 = vweird.f32 %v641
        %vm649 = vmor %vm647, %vm648
        %v650 = vsel %vm649, %v641, %v646
        %v651 = vrsqrt.pop %v509
        %v652 = vmul.f32 %v651, %v509
        %v653 = vmul.f32 %v652, %v651
        %v654 = vmul.f32 0.5, %v653
        %v655 = vsub.f32 1.5, %v654
        %v656 = vmul.f32 %v651, %v655
        %vm657 = vweird.f32 %v509
        %vm658 = vweird.f32 %v651
        %vm659 = vmor %vm657, %vm658
        %v660 = vsel %vm659, %v651, %v656
        %v661 = vrsqrt.pop %v510
        %v662 = vmul.f32 %v661, %v510
        %v663 = vmul.f32 %v662, %v661
        %v664 = vmul.f32 0.5, %v663
        %v665 = vsub.f32 1.5, %v664
        %v666 = vmul.f32 %v661, %v665
        %vm667 = vweird.f32 %v510
        %vm668 = vweird.f32 %v661
        %vm669 = vmor %vm667, %vm668
        %v670 = vsel %vm669, %v661, %v666
        %v671 = vmul.f32 %v407, %v520
        %v672 = vmul.f32 %v408, %v530
        %v673 = vmul.f32 %v409, %v540
        %v674 = vmul.f32 %v410, %v550
        %v675 = vmul.f32 %v411, %v560
        %v676 = vmul.f32 %v412, %v570
        %v677 = vmul.f32 %v413, %v580
        %v678 = vmul.f32 %v414, %v590
        %v679 = vmul.f32 %v415, %v600
        %v680 = vmul.f32 %v416, %v610
        %v681 = vmul.f32 %v417, %v620
        %v682 = vmul.f32 %v418, %v630
        %v683 = vmul.f32 %v419, %v640
        %v684 = vmul.f32 %v420, %v650
        %v685 = vmul.f32 %v421, %v660
        %v686 = vmul.f32 %v422, %v670
        %v688 = vperm.slane %v423, 0
        %v690 = vmul.f32 %v671, %v688
        %v691 = vmul.f32 %v672, %v688
        %v692 = vmul.f32 %v673, %v688
        %v693 = vmul.f32 %v674, %v688
        %v694 = vmul.f32 %v675, %v688
        %v695 = vmul.f32 %v676, %v688
        %v696 = vmul.f32 %v677, %v688
        %v697 = vmul.f32 %v678, %v688
        %v698 = vmul.f32 %v679, %v688
        %v699 = vmul.f32 %v680, %v688
        %v700 = vmul.f32 %v681, %v688
        %v701 = vmul.f32 %v682, %v688
        %v702 = vmul.f32 %v683, %v688
        %v703 = vmul.f32 %v684, %v688
        %v704 = vmul.f32 %v685, %v688
        %v705 = vmul.f32 %v686, %v688
        %v706 = vpack.c.bf16 %v691, %v690
        %v707 = vpack.c.bf16 %v693, %v692
        %v708 = vpack.c.bf16 %v695, %v694
        %v709 = vpack.c.bf16 %v697, %v696
        %v710 = vpack.c.bf16 %v699, %v698
        %v711 = vpack.c.bf16 %v701, %v700
        %v712 = vpack.c.bf16 %v703, %v702
        %v713 = vpack.c.bf16 %v705, %v704
        %v714 = vld [vmem:[#allocation7] sm:$0xf]
        %v715 = vld [vmem:[#allocation7 + $0x4] sm:$0xf]
        %v716 = vld [vmem:[#allocation7 + $0x8] sm:$0xf]
        %v717 = vld [vmem:[#allocation7 + $0xc] sm:$0xf]
        %v718 = vld [vmem:[#allocation7 + $0x10] sm:$0xf]
        %v719 = vld [vmem:[#allocation7 + $0x14] sm:$0xf]
        %v720 = vld [vmem:[#allocation7 + $0x18] sm:$0xf]
        %v721 = vld [vmem:[#allocation7 + $0x1c] sm:$0xf]
        %v722 = vld [vmem:[#allocation7 + $0x20] sm:$0xf]
        %v723 = vld [vmem:[#allocation7 + $0x24] sm:$0xf]
        %v724 = vld [vmem:[#allocation7 + $0x28] sm:$0xf]
        %v725 = vld [vmem:[#allocation7 + $0x2c] sm:$0xf]
        %v726 = vld [vmem:[#allocation7 + $0x30] sm:$0xf]
        %v727 = vld [vmem:[#allocation7 + $0x34] sm:$0xf]
        %v728 = vld [vmem:[#allocation7 + $0x38] sm:$0xf]
        %v729 = vld [vmem:[#allocation7 + $0x3c] sm:$0xf]
        %v746 = vunpack.c.l.b16 %v714
        %v747 = vunpack.c.l.b16 %v715
        %v748 = vunpack.c.l.b16 %v716
        %v749 = vunpack.c.l.b16 %v717
        %v750 = vunpack.c.l.b16 %v718
        %v751 = vunpack.c.l.b16 %v719
        %v752 = vunpack.c.l.b16 %v720
        %v753 = vunpack.c.l.b16 %v721
        %v754 = vunpack.c.l.b16 %v722
        %v755 = vunpack.c.l.b16 %v723
        %v756 = vunpack.c.l.b16 %v724
        %v757 = vunpack.c.l.b16 %v725
        %v758 = vunpack.c.l.b16 %v726
        %v759 = vunpack.c.l.b16 %v727
        %v760 = vunpack.c.l.b16 %v728
        %v761 = vunpack.c.l.b16 %v729
        %v762 = vpack.c.b16 %v747, %v746
        %v763 = vpack.c.b16 %v749, %v748
        %v764 = vpack.c.b16 %v751, %v750
        %v765 = vpack.c.b16 %v753, %v752
        %v766 = vpack.c.b16 %v755, %v754
        %v767 = vpack.c.b16 %v757, %v756
        %v768 = vpack.c.b16 %v759, %v758
        %v769 = vpack.c.b16 %v761, %v760
        %778 = vmatpush.bf16.msra.mxu0 %v769
        %779 = vmatpush.bf16.msra.mxu0 %v768
        %780 = vmatpush.bf16.msra.mxu0 %v767
        %781 = vmatpush.bf16.msra.mxu0 %v766
        %782 = vmatpush.bf16.msra.mxu0 %v765
        %783 = vmatpush.bf16.msra.mxu0 %v764
        %784 = vmatpush.bf16.msra.mxu0 %v763
        %785 = vmatpush.bf16.msra.mxu0 %v762
        %786 = vmatmul.bf16.gmra.mxu0 %v706
        %v787 = vpop.f32.mrf.mxu0
        %v788 = vadd.f32 0.0, %v787
        %v789 = vpop.f32.mrf.mxu0
        %v790 = vadd.f32 0.0, %v789
        %791 = vmatmul.bf16.gmra.mxu0 %v707
        %v792 = vpop.f32.mrf.mxu0
        %v793 = vadd.f32 0.0, %v792
        %v794 = vpop.f32.mrf.mxu0
        %v795 = vadd.f32 0.0, %v794
        %796 = vmatmul.bf16.gmra.mxu0 %v708
        %v797 = vpop.f32.mrf.mxu0
        %v798 = vadd.f32 0.0, %v797
        %v799 = vpop.f32.mrf.mxu0
        %v800 = vadd.f32 0.0, %v799
        %801 = vmatmul.bf16.gmra.mxu0 %v709
        %v802 = vpop.f32.mrf.mxu0
        %v803 = vadd.f32 0.0, %v802
        %v804 = vpop.f32.mrf.mxu0
        %v805 = vadd.f32 0.0, %v804
        %806 = vmatmul.bf16.gmra.mxu0 %v710
        %v807 = vpop.f32.mrf.mxu0
        %v808 = vadd.f32 0.0, %v807
        %v809 = vpop.f32.mrf.mxu0
        %v810 = vadd.f32 0.0, %v809
        %811 = vmatmul.bf16.gmra.mxu0 %v711
        %v812 = vpop.f32.mrf.mxu0
        %v813 = vadd.f32 0.0, %v812
        %v814 = vpop.f32.mrf.mxu0
        %v815 = vadd.f32 0.0, %v814
        %816 = vmatmul.bf16.gmra.mxu0 %v712
        %v817 = vpop.f32.mrf.mxu0
        %v818 = vadd.f32 0.0, %v817
        %v819 = vpop.f32.mrf.mxu0
        %v820 = vadd.f32 0.0, %v819
        %821 = vmatmul.bf16.gmra.mxu0 %v713
        %v822 = vpop.f32.mrf.mxu0
        %v823 = vadd.f32 0.0, %v822
        %v824 = vpop.f32.mrf.mxu0
        %v825 = vadd.f32 0.0, %v824
        %826 = vdwg.mxu0
        %v827 = vpack.c.bf16 %v788, %v788
        %v828 = vpack.c.bf16 %v790, %v790
        %v829 = vpack.c.bf16 %v793, %v793
        %v830 = vpack.c.bf16 %v795, %v795
        %v831 = vpack.c.bf16 %v798, %v798
        %v832 = vpack.c.bf16 %v800, %v800
        %v833 = vpack.c.bf16 %v803, %v803
        %v834 = vpack.c.bf16 %v805, %v805
        %v835 = vpack.c.bf16 %v808, %v808
        %v836 = vpack.c.bf16 %v810, %v810
        %v837 = vpack.c.bf16 %v813, %v813
        %v838 = vpack.c.bf16 %v815, %v815
        %v839 = vpack.c.bf16 %v818, %v818
        %v840 = vpack.c.bf16 %v820, %v820
        %v841 = vpack.c.bf16 %v823, %v823
        %v842 = vpack.c.bf16 %v825, %v825
        %843 = vst [vmem:[%s388] sm:$0xf] %v827
        %844 = vst [vmem:[%s388 + $0x4] sm:$0xf] %v828
        %845 = vst [vmem:[%s388 + $0x8] sm:$0xf] %v829
        %846 = vst [vmem:[%s388 + $0xc] sm:$0xf] %v830
        %847 = vst [vmem:[%s388 + $0x10] sm:$0xf] %v831
        %848 = vst [vmem:[%s388 + $0x14] sm:$0xf] %v832
        %849 = vst [vmem:[%s388 + $0x18] sm:$0xf] %v833
        %850 = vst [vmem:[%s388 + $0x1c] sm:$0xf] %v834
        %851 = vst [vmem:[%s388 + $0x20] sm:$0xf] %v835
        %852 = vst [vmem:[%s388 + $0x24] sm:$0xf] %v836
        %853 = vst [vmem:[%s388 + $0x28] sm:$0xf] %v837
        %854 = vst [vmem:[%s388 + $0x2c] sm:$0xf] %v838
        %855 = vst [vmem:[%s388 + $0x30] sm:$0xf] %v839
        %856 = vst [vmem:[%s388 + $0x34] sm:$0xf] %v840
        %857 = vst [vmem:[%s388 + $0x38] sm:$0xf] %v841
        %858 = vst [vmem:[%s388 + $0x3c] sm:$0xf] %v842
        %v859 = vld [vmem:[#allocation8] sm:$0xf]
        %v860 = vld [vmem:[#allocation8 + $0x4] sm:$0xf]
        %v861 = vld [vmem:[#allocation8 + $0x8] sm:$0xf]
        %v862 = vld [vmem:[#allocation8 + $0xc] sm:$0xf]
        %v863 = vld [vmem:[#allocation8 + $0x10] sm:$0xf]
        %v864 = vld [vmem:[#allocation8 + $0x14] sm:$0xf]
        %v865 = vld [vmem:[#allocation8 + $0x18] sm:$0xf]
        %v866 = vld [vmem:[#allocation8 + $0x1c] sm:$0xf]
        %v867 = vld [vmem:[#allocation8 + $0x20] sm:$0xf]
        %v868 = vld [vmem:[#allocation8 + $0x24] sm:$0xf]
        %v869 = vld [vmem:[#allocation8 + $0x28] sm:$0xf]
        %v870 = vld [vmem:[#allocation8 + $0x2c] sm:$0xf]
        %v871 = vld [vmem:[#allocation8 + $0x30] sm:$0xf]
        %v872 = vld [vmem:[#allocation8 + $0x34] sm:$0xf]
        %v873 = vld [vmem:[#allocation8 + $0x38] sm:$0xf]
        %v874 = vld [vmem:[#allocation8 + $0x3c] sm:$0xf]
        %v891 = vunpack.c.l.b16 %v859
        %v892 = vunpack.c.l.b16 %v860
        %v893 = vunpack.c.l.b16 %v861
        %v894 = vunpack.c.l.b16 %v862
        %v895 = vunpack.c.l.b16 %v863
        %v896 = vunpack.c.l.b16 %v864
        %v897 = vunpack.c.l.b16 %v865
        %v898 = vunpack.c.l.b16 %v866
        %v899 = vunpack.c.l.b16 %v867
        %v900 = vunpack.c.l.b16 %v868
        %v901 = vunpack.c.l.b16 %v869
        %v902 = vunpack.c.l.b16 %v870
        %v903 = vunpack.c.l.b16 %v871
        %v904 = vunpack.c.l.b16 %v872
        %v905 = vunpack.c.l.b16 %v873
        %v906 = vunpack.c.l.b16 %v874
        %v907 = vpack.c.b16 %v892, %v891
        %v908 = vpack.c.b16 %v894, %v893
        %v909 = vpack.c.b16 %v896, %v895
        %v910 = vpack.c.b16 %v898, %v897
        %v911 = vpack.c.b16 %v900, %v899
        %v912 = vpack.c.b16 %v902, %v901
        %v913 = vpack.c.b16 %v904, %v903
        %v914 = vpack.c.b16 %v906, %v905
        %923 = vmatpush.bf16.msra.mxu0 %v914
        %924 = vmatpush.bf16.msra.mxu0 %v913
        %925 = vmatpush.bf16.msra.mxu0 %v912
        %926 = vmatpush.bf16.msra.mxu0 %v911
        %927 = vmatpush.bf16.msra.mxu0 %v910
        %928 = vmatpush.bf16.msra.mxu0 %v909
        %929 = vmatpush.bf16.msra.mxu0 %v908
        %930 = vmatpush.bf16.msra.mxu0 %v907
        %931 = vmatmul.bf16.gmra.mxu0 %v706
        %v932 = vpop.f32.mrf.mxu0
        %v933 = vadd.f32 0.0, %v932
        %v934 = vpop.f32.mrf.mxu0
        %v935 = vadd.f32 0.0, %v934
        %936 = vmatmul.bf16.gmra.mxu0 %v707
        %v937 = vpop.f32.mrf.mxu0
        %v938 = vadd.f32 0.0, %v937
        %v939 = vpop.f32.mrf.mxu0
        %v940 = vadd.f32 0.0, %v939
        %941 = vmatmul.bf16.gmra.mxu0 %v708
        %v942 = vpop.f32.mrf.mxu0
        %v943 = vadd.f32 0.0, %v942
        %v944 = vpop.f32.mrf.mxu0
        %v945 = vadd.f32 0.0, %v944
        %946 = vmatmul.bf16.gmra.mxu0 %v709
        %v947 = vpop.f32.mrf.mxu0
        %v948 = vadd.f32 0.0, %v947
        %v949 = vpop.f32.mrf.mxu0
        %v950 = vadd.f32 0.0, %v949
        %951 = vmatmul.bf16.gmra.mxu0 %v710
        %v952 = vpop.f32.mrf.mxu0
        %v953 = vadd.f32 0.0, %v952
        %v954 = vpop.f32.mrf.mxu0
        %v955 = vadd.f32 0.0, %v954
        %956 = vmatmul.bf16.gmra.mxu0 %v711
        %v957 = vpop.f32.mrf.mxu0
        %v958 = vadd.f32 0.0, %v957
        %v959 = vpop.f32.mrf.mxu0
        %v960 = vadd.f32 0.0, %v959
        %961 = vmatmul.bf16.gmra.mxu0 %v712
        %v962 = vpop.f32.mrf.mxu0
        %v963 = vadd.f32 0.0, %v962
        %v964 = vpop.f32.mrf.mxu0
        %v965 = vadd.f32 0.0, %v964
        %966 = vmatmul.bf16.gmra.mxu0 %v713
        %v967 = vpop.f32.mrf.mxu0
        %v968 = vadd.f32 0.0, %v967
        %v969 = vpop.f32.mrf.mxu0
        %v970 = vadd.f32 0.0, %v969
        %971 = vdwg.mxu0
        %v972 = vpack.c.bf16 %v933, %v933
        %v973 = vpack.c.bf16 %v935, %v935
        %v974 = vpack.c.bf16 %v938, %v938
        %v975 = vpack.c.bf16 %v940, %v940
        %v976 = vpack.c.bf16 %v943, %v943
        %v977 = vpack.c.bf16 %v945, %v945
        %v978 = vpack.c.bf16 %v948, %v948
        %v979 = vpack.c.bf16 %v950, %v950
        %v980 = vpack.c.bf16 %v953, %v953
        %v981 = vpack.c.bf16 %v955, %v955
        %v982 = vpack.c.bf16 %v958, %v958
        %v983 = vpack.c.bf16 %v960, %v960
        %v984 = vpack.c.bf16 %v963, %v963
        %v985 = vpack.c.bf16 %v965, %v965
        %v986 = vpack.c.bf16 %v968, %v968
        %v987 = vpack.c.bf16 %v970, %v970
        %988 = vst [vmem:[%s395] sm:$0xf] %v972
        %989 = vst [vmem:[%s395 + $0x4] sm:$0xf] %v973
        %990 = vst [vmem:[%s395 + $0x8] sm:$0xf] %v974
        %991 = vst [vmem:[%s395 + $0xc] sm:$0xf] %v975
        %992 = vst [vmem:[%s395 + $0x10] sm:$0xf] %v976
        %993 = vst [vmem:[%s395 + $0x14] sm:$0xf] %v977
        %994 = vst [vmem:[%s395 + $0x18] sm:$0xf] %v978
        %995 = vst [vmem:[%s395 + $0x1c] sm:$0xf] %v979
        %996 = vst [vmem:[%s395 + $0x20] sm:$0xf] %v980
        %997 = vst [vmem:[%s395 + $0x24] sm:$0xf] %v981
        %998 = vst [vmem:[%s395 + $0x28] sm:$0xf] %v982
        %999 = vst [vmem:[%s395 + $0x2c] sm:$0xf] %v983
        %1000 = vst [vmem:[%s395 + $0x30] sm:$0xf] %v984
        %1001 = vst [vmem:[%s395 + $0x34] sm:$0xf] %v985
        %1002 = vst [vmem:[%s395 + $0x38] sm:$0xf] %v986
        %1003 = vst [vmem:[%s395 + $0x3c] sm:$0xf] %v987
        %v1004 = vld [vmem:[#allocation10] sm:$0xf]
        %v1005 = vld [vmem:[#allocation10 + $0x4] sm:$0xf]
        %v1006 = vld [vmem:[#allocation10 + $0x8] sm:$0xf]
        %v1007 = vld [vmem:[#allocation10 + $0xc] sm:$0xf]
        %v1008 = vld [vmem:[#allocation10 + $0x10] sm:$0xf]
        %v1009 = vld [vmem:[#allocation10 + $0x14] sm:$0xf]
        %v1010 = vld [vmem:[#allocation10 + $0x18] sm:$0xf]
        %v1011 = vld [vmem:[#allocation10 + $0x1c] sm:$0xf]
        %v1012 = vld [vmem:[#allocation10 + $0x20] sm:$0xf]
        %v1013 = vld [vmem:[#allocation10 + $0x24] sm:$0xf]
        %v1014 = vld [vmem:[#allocation10 + $0x28] sm:$0xf]
        %v1015 = vld [vmem:[#allocation10 + $0x2c] sm:$0xf]
        %v1016 = vld [vmem:[#allocation10 + $0x30] sm:$0xf]
        %v1017 = vld [vmem:[#allocation10 + $0x34] sm:$0xf]
        %v1018 = vld [vmem:[#allocation10 + $0x38] sm:$0xf]
        %v1019 = vld [vmem:[#allocation10 + $0x3c] sm:$0xf]
        %v1036 = vunpack.c.l.b16 %v1004
        %v1037 = vunpack.c.l.b16 %v1005
        %v1038 = vunpack.c.l.b16 %v1006
        %v1039 = vunpack.c.l.b16 %v1007
        %v1040 = vunpack.c.l.b16 %v1008
        %v1041 = vunpack.c.l.b16 %v1009
        %v1042 = vunpack.c.l.b16 %v1010
        %v1043 = vunpack.c.l.b16 %v1011
        %v1044 = vunpack.c.l.b16 %v1012
        %v1045 = vunpack.c.l.b16 %v1013
        %v1046 = vunpack.c.l.b16 %v1014
        %v1047 = vunpack.c.l.b16 %v1015
        %v1048 = vunpack.c.l.b16 %v1016
        %v1049 = vunpack.c.l.b16 %v1017
        %v1050 = vunpack.c.l.b16 %v1018
        %v1051 = vunpack.c.l.b16 %v1019
        %v1052 = vpack.c.b16 %v1037, %v1036
        %v1053 = vpack.c.b16 %v1039, %v1038
        %v1054 = vpack.c.b16 %v1041, %v1040
        %v1055 = vpack.c.b16 %v1043, %v1042
        %v1056 = vpack.c.b16 %v1045, %v1044
        %v1057 = vpack.c.b16 %v1047, %v1046
        %v1058 = vpack.c.b16 %v1049, %v1048
        %v1059 = vpack.c.b16 %v1051, %v1050
        %1068 = vmatpush.bf16.msra.mxu0 %v1059
        %1069 = vmatpush.bf16.msra.mxu0 %v1058
        %1070 = vmatpush.bf16.msra.mxu0 %v1057
        %1071 = vmatpush.bf16.msra.mxu0 %v1056
        %1072 = vmatpush.bf16.msra.mxu0 %v1055
        %1073 = vmatpush.bf16.msra.mxu0 %v1054
        %1074 = vmatpush.bf16.msra.mxu0 %v1053
        %1075 = vmatpush.bf16.msra.mxu0 %v1052
        %1076 = vmatmul.bf16.gmra.mxu0 %v706
        %v1077 = vpop.f32.mrf.mxu0
        %v1078 = vadd.f32 0.0, %v1077
        %v1079 = vpop.f32.mrf.mxu0
        %v1080 = vadd.f32 0.0, %v1079
        %1081 = vmatmul.bf16.gmra.mxu0 %v707
        %v1082 = vpop.f32.mrf.mxu0
        %v1083 = vadd.f32 0.0, %v1082
        %v1084 = vpop.f32.mrf.mxu0
        %v1085 = vadd.f32 0.0, %v1084
        %1086 = vmatmul.bf16.gmra.mxu0 %v708
        %v1087 = vpop.f32.mrf.mxu0
        %v1088 = vadd.f32 0.0, %v1087
        %v1089 = vpop.f32.mrf.mxu0
        %v1090 = vadd.f32 0.0, %v1089
        %1091 = vmatmul.bf16.gmra.mxu0 %v709
        %v1092 = vpop.f32.mrf.mxu0
        %v1093 = vadd.f32 0.0, %v1092
        %v1094 = vpop.f32.mrf.mxu0
        %v1095 = vadd.f32 0.0, %v1094
        %1096 = vmatmul.bf16.gmra.mxu0 %v710
        %v1097 = vpop.f32.mrf.mxu0
        %v1098 = vadd.f32 0.0, %v1097
        %v1099 = vpop.f32.mrf.mxu0
        %v1100 = vadd.f32 0.0, %v1099
        %1101 = vmatmul.bf16.gmra.mxu0 %v711
        %v1102 = vpop.f32.mrf.mxu0
        %v1103 = vadd.f32 0.0, %v1102
        %v1104 = vpop.f32.mrf.mxu0
        %v1105 = vadd.f32 0.0, %v1104
        %1106 = vmatmul.bf16.gmra.mxu0 %v712
        %v1107 = vpop.f32.mrf.mxu0
        %v1108 = vadd.f32 0.0, %v1107
        %v1109 = vpop.f32.mrf.mxu0
        %v1110 = vadd.f32 0.0, %v1109
        %1111 = vmatmul.bf16.gmra.mxu0 %v713
        %v1112 = vpop.f32.mrf.mxu0
        %v1113 = vadd.f32 0.0, %v1112
        %v1114 = vpop.f32.mrf.mxu0
        %v1115 = vadd.f32 0.0, %v1114
        %1116 = vdwg.mxu0
        %v1117 = vpack.c.bf16 %v1078, %v1078
        %v1118 = vpack.c.bf16 %v1080, %v1080
        %v1119 = vpack.c.bf16 %v1083, %v1083
        %v1120 = vpack.c.bf16 %v1085, %v1085
        %v1121 = vpack.c.bf16 %v1088, %v1088
        %v1122 = vpack.c.bf16 %v1090, %v1090
        %v1123 = vpack.c.bf16 %v1093, %v1093
        %v1124 = vpack.c.bf16 %v1095, %v1095
        %v1125 = vpack.c.bf16 %v1098, %v1098
        %v1126 = vpack.c.bf16 %v1100, %v1100
        %v1127 = vpack.c.bf16 %v1103, %v1103
        %v1128 = vpack.c.bf16 %v1105, %v1105
        %v1129 = vpack.c.bf16 %v1108, %v1108
        %v1130 = vpack.c.bf16 %v1110, %v1110
        %v1131 = vpack.c.bf16 %v1113, %v1113
        %v1132 = vpack.c.bf16 %v1115, %v1115
        %1133 = vst [vmem:[%s402] sm:$0xf] %v1117
        %1134 = vst [vmem:[%s402 + $0x4] sm:$0xf] %v1118
        %1135 = vst [vmem:[%s402 + $0x8] sm:$0xf] %v1119
        %1136 = vst [vmem:[%s402 + $0xc] sm:$0xf] %v1120
        %1137 = vst [vmem:[%s402 + $0x10] sm:$0xf] %v1121
        %1138 = vst [vmem:[%s402 + $0x14] sm:$0xf] %v1122
        %1139 = vst [vmem:[%s402 + $0x18] sm:$0xf] %v1123
        %1140 = vst [vmem:[%s402 + $0x1c] sm:$0xf] %v1124
        %1141 = vst [vmem:[%s402 + $0x20] sm:$0xf] %v1125
        %1142 = vst [vmem:[%s402 + $0x24] sm:$0xf] %v1126
        %1143 = vst [vmem:[%s402 + $0x28] sm:$0xf] %v1127
        %1144 = vst [vmem:[%s402 + $0x2c] sm:$0xf] %v1128
        %1145 = vst [vmem:[%s402 + $0x30] sm:$0xf] %v1129
        %1146 = vst [vmem:[%s402 + $0x34] sm:$0xf] %v1130
        %1147 = vst [vmem:[%s402 + $0x38] sm:$0xf] %v1131
        %1148 = vst [vmem:[%s402 + $0x3c] sm:$0xf] %v1132
        %s1149 = sand.u32 %s164, 1
        %s1150 = scalar_lea.sflag [#allocation4], %s1149
        %s1151 = sand.u32 %s164, 1
        %s1152 = smul.addr %s1151, 64
        %s1153 = scalar_lea.vmem [#allocation11], %s1152
        %s1154 = sand.u32 %s30, 1
        %s1155 = scalar_lea.sflag [#allocation13], %s1154
        %s1156 = sand.u32 %s192, 1
        %s1157 = smul.addr %s1156, 64
        %s1158 = scalar_lea.vmem [#allocation12], %s1157
        %s1159 = sand.u32 %s30, 1
        %s1160 = scalar_lea.sflag [#allocation13], %s1159
        %s1161 = sand.u32 %s220, 1
        %s1162 = smul.addr %s1161, 64
        %s1163 = scalar_lea.vmem [#allocation14], %s1162
        // Predicated region
        $region61: #{tpu_custom_call.1} parent=39 // pred_check
          %p1164 = pneg %p174
        $region62: #{tpu_custom_call.1} parent=39 // pred_check_branch
          %1166 = sbr.rel (%p1164) target = $region64
        $region63: #{tpu_custom_call.1} parent=39 // pred_region
          %s1167 = smul.u32 16, %s35
          %1169 = vsyncadd %s1150, 0
          %s1170 = smul.addr %s34, 32
          %s1171 = sadd.s32 %s1167, %s1170
          %s1172 = smul.addr %s1171, 4
          %s1173 = scalar_lea.hbm %s5, %s1172
          %s1174 = sshll.u32 %s1153, 4
          %s1175 = int_to_ptr.vmem [resolvable:$true] %s1174
          %s1176 = sshll.u32 %s1173, 4
          %s1177 = int_to_ptr.hbm [resolvable:$true] %s1176
          %1182 = dma.vmem_to_hbm [thread:$0]  %s1175, 1024, %s1177, %s1150, 64, 64, 4
        $region64: #{tpu_custom_call.1} parent=39 // pred_fallthru
          _
        // Predicated region
        $region65: #{tpu_custom_call.1} parent=39 // pred_check
          %p1183 = pneg %p202
        $region66: #{tpu_custom_call.1} parent=39 // pred_check_branch
          %1185 = sbr.rel (%p1183) target = $region68
        $region67: #{tpu_custom_call.1} parent=39 // pred_region
          %s1186 = smul.u32 16, %s35
          %1188 = vsyncadd %s1155, 0
          %s1189 = smul.addr %s34, 32
          %s1190 = sadd.s32 %s1186, %s1189
          %s1191 = smul.addr %s1190, 4
          %s1192 = scalar_lea.hbm %s6, %s1191
          %s1193 = sshll.u32 %s1158, 4
          %s1194 = int_to_ptr.vmem [resolvable:$true] %s1193
          %s1195 = sshll.u32 %s1192, 4
          %s1196 = int_to_ptr.hbm [resolvable:$true] %s1195
          %1201 = dma.vmem_to_hbm [thread:$0]  %s1194, 1024, %s1196, %s1155, 64, 64, 4
        $region68: #{tpu_custom_call.1} parent=39 // pred_fallthru
          _
        // Predicated region
        $region69: #{tpu_custom_call.1} parent=39 // pred_check
          %p1202 = pneg %p230
        $region70: #{tpu_custom_call.1} parent=39 // pred_check_branch
          %1204 = sbr.rel (%p1202) target = $region72
        $region71: #{tpu_custom_call.1} parent=39 // pred_region
          %s1205 = smul.u32 16, %s35
          %1207 = vsyncadd %s1160, 0
          %s1208 = smul.addr %s34, 32
          %s1209 = sadd.s32 %s1205, %s1208
          %s1210 = smul.addr %s1209, 4
          %s1211 = scalar_lea.hbm %s7, %s1210
          %s1212 = sshll.u32 %s1163, 4
          %s1213 = int_to_ptr.vmem [resolvable:$true] %s1212
          %s1214 = sshll.u32 %s1211, 4
          %s1215 = int_to_ptr.hbm [resolvable:$true] %s1214
          %1220 = dma.vmem_to_hbm [thread:$0]  %s1213, 1024, %s1215, %s1160, 64, 64, 4
        $region72: #{tpu_custom_call.1} parent=39 // pred_fallthru
          _
      $region40: #{tpu_custom_call.1} parent=5 // pred_fallthru
        _
      %p1221 = scmp.le.s32.totalorder 2, %s25
      // Predicated region
      $region73: #{tpu_custom_call.1} parent=5 // pred_check
        %p1222 = pneg %p1221
      $region74: #{tpu_custom_call.1} parent=5 // pred_check_branch
        %1224 = sbr.rel (%p1222) target = $region76
      $region75: #{tpu_custom_call.1} parent=5 // pred_region
        %s1225 = ssub.s32 %s25, 2
        // Predicated region
        $region77: #{tpu_custom_call.1} parent=75 // pred_check
          %p1226 = pneg %p180
        $region78: #{tpu_custom_call.1} parent=75 // pred_check_branch
          %1228 = sbr.rel (%p1226) target = $region80
        $region79: #{tpu_custom_call.1} parent=75 // pred_region
          %s1229 = sand.u32 %s165, 1
          %s1230 = scalar_lea.sflag [#allocation4], %s1229
          %s1231 = sand.u32 %s165, 1
          %s1232 = smul.addr %s1231, 64
          %s1233 = scalar_lea.vmem [#allocation11], %s1232
          %1235 = dma.done %s1230, 1024
        $region80: #{tpu_custom_call.1} parent=75 // pred_fallthru
          _
        // Predicated region
        $region81: #{tpu_custom_call.1} parent=75 // pred_check
          %p1236 = pneg %p208
        $region82: #{tpu_custom_call.1} parent=75 // pred_check_branch
          %1238 = sbr.rel (%p1236) target = $region84
        $region83: #{tpu_custom_call.1} parent=75 // pred_region
          %s1239 = sand.u32 %s31, 1
          %s1240 = scalar_lea.sflag [#allocation13], %s1239
          %s1241 = sand.u32 %s193, 1
          %s1242 = smul.addr %s1241, 64
          %s1243 = scalar_lea.vmem [#allocation12], %s1242
          %1245 = dma.done %s1240, 1024
        $region84: #{tpu_custom_call.1} parent=75 // pred_fallthru
          _
        // Predicated region
        $region85: #{tpu_custom_call.1} parent=75 // pred_check
          %p1246 = pneg %p236
        $region86: #{tpu_custom_call.1} parent=75 // pred_check_branch
          %1248 = sbr.rel (%p1246) target = $region88
        $region87: #{tpu_custom_call.1} parent=75 // pred_region
          %s1249 = sand.u32 %s31, 1
          %s1250 = scalar_lea.sflag [#allocation13], %s1249
          %s1251 = sand.u32 %s221, 1
          %s1252 = smul.addr %s1251, 64
          %s1253 = scalar_lea.vmem [#allocation14], %s1252
          %1255 = dma.done %s1250, 1024
        $region88: #{tpu_custom_call.1} parent=75 // pred_fallthru
          _
      $region76: #{tpu_custom_call.1} parent=5 // pred_fallthru
        _
    $region6: #{tpu_custom_call.1} parent=1 // loop_footer
      %s29 = sadd.s32 1, %s25
    $region7: #{tpu_custom_call.1} parent=1 // loop_footer_branch
      %24 = sbr.rel target = $region3
    $region8: #{tpu_custom_call.1} parent=1 // loop_exit
      _
    %1256 = vsyncpa [#allocation3], 1
    %s1257 = scalar_lea.sflag [#allocation3], 1
    %1258 = vsyncpa %s1257, 1
    %1259 = vsyncpa [#allocation6], 1
    %1260 = vsyncpa [#allocation9], 1
    %1261 = vsyncpa [#allocation4], 1
    %s1262 = scalar_lea.sflag [#allocation4], 1
    %1263 = vsyncpa %s1262, 1
    %1264 = vsyncpa [#allocation13], 1
    %s1265 = scalar_lea.sflag [#allocation13], 1
    %1266 = vsyncpa %s1265, 1

</llo_original>
